<compile_context>
chip_gen: v6e
topology: v6e:2x2x1
jax: 0.10.0
libtpu: 0.0.40
codegen_flags: <defaults>
</compile_context>

<pallas_src>
import math
import functools

import numpy as np
import jax
import jax.numpy as jnp
from jax.experimental import pallas as pl
from jax.experimental.pallas import tpu as pltpu

EPS = 1e-6
MXU_DTYPE = jnp.bfloat16          # MXU input dtype (accumulation stays f32)
LANE = 128                        # pad small Cout to a lane-dense multiple
VMEM_LIMIT = 40 * 1024 * 1024     # headroom below v7x's 64 MiB physical VMEM


# ------------------------------------------------------------------
# small helpers
# ------------------------------------------------------------------
def _round_up(x, m):
    return (x + m - 1) // m * m


def _largest_divisor_leq(n, cap):
    cap = max(1, min(n, cap))
    for d in range(cap, 0, -1):
        if n % d == 0:
            return d
    return 1


def _same_pad(k, s):
    p = k - s
    return (p // 2 + p % 2, p // 2)


# ------------------------------------------------------------------
# GroupNorm + SiLU (two-pass, depth-chunked, channels-last)
# ------------------------------------------------------------------
def _gn_stats_kernel(x_ref, o_ref):
    @pl.when(pl.program_id(1) == 0)
    def _():
        o_ref[...] = jnp.zeros_like(o_ref)

    x = x_ref[0].astype(jnp.float32)                  # (td, H, W, C)
    xx = x * x
    s = jnp.sum(jnp.sum(jnp.sum(x, axis=0), axis=0), axis=0, keepdims=True)
    sq = jnp.sum(jnp.sum(jnp.sum(xx, axis=0), axis=0), axis=0, keepdims=True)
    o_ref[0, 0:1, :] += s                             # (1, C)
    o_ref[0, 1:2, :] += sq                            # (1, C)


def _gn_apply_kernel(x_ref, sc_ref, sh_ref, o_ref, *, apply_silu):
    x = x_ref[0].astype(jnp.float32)                  # (td, H, W, C)
    y = x * sc_ref[0] + sh_ref[0]                     # (1, C) broadcasts on lanes
    if apply_silu:
        y = y * jax.nn.sigmoid(y)                     # SiLU fused (EUP)
    o_ref[0] = y.astype(o_ref.dtype)


@functools.lru_cache(maxsize=None)
def _build_gn_stats(N, D, H, W, C, td):
    call = pl.pallas_call(
        _gn_stats_kernel,
        out_shape=jax.ShapeDtypeStruct((N, 2, C), jnp.float32),
        grid=(N, D // td),
        in_specs=[pl.BlockSpec((1, td, H, W, C), lambda n, c: (n, c, 0, 0, 0))],
        out_specs=pl.BlockSpec((1, 2, C), lambda n, c: (n, 0, 0)),
        compiler_params=pltpu.CompilerParams(
            dimension_semantics=("parallel", "arbitrary"),
            vmem_limit_bytes=VMEM_LIMIT),
    )
    return jax.jit(call)


@functools.lru_cache(maxsize=None)
def _build_gn_apply(N, D, H, W, C, td, apply_silu):
    call = pl.pallas_call(
        functools.partial(_gn_apply_kernel, apply_silu=apply_silu),
        out_shape=jax.ShapeDtypeStruct((N, D, H, W, C), jnp.float32),
        grid=(N, D // td),
        in_specs=[
            pl.BlockSpec((1, td, H, W, C), lambda n, c: (n, c, 0, 0, 0)),
            pl.BlockSpec((1, 1, C), lambda n, c: (n, 0, 0)),
            pl.BlockSpec((1, 1, C), lambda n, c: (n, 0, 0)),
        ],
        out_specs=pl.BlockSpec((1, td, H, W, C), lambda n, c: (n, c, 0, 0, 0)),
        compiler_params=pltpu.CompilerParams(
            dimension_semantics=("parallel", "arbitrary"),
            vmem_limit_bytes=VMEM_LIMIT),
    )
    return jax.jit(call)


def group_norm_silu(x, gamma, beta, num_groups, apply_silu=True):
    """GroupNorm(eps=1e-6, affine) + fused SiLU on channels-last (N,D,H,W,C)."""
    N, D, H, W, C = x.shape
    G = num_groups
    assert C % G == 0
    Cg = C // G
    # Chunk the depth axis so one block stays small in VMEM on every generation.
    td = _largest_divisor_leq(D, max(1, (4 << 20) // max(1, H * W * C * 4)))

    stats = _build_gn_stats(N, D, H, W, C, td)(x)             # (N, 2, C)
    cnt = float(D * H * W * Cg)
    gsum = stats[:, 0, :].reshape(N, G, Cg).sum(-1)
    gsq = stats[:, 1, :].reshape(N, G, Cg).sum(-1)
    mean = gsum / cnt
    var = gsq / cnt - mean * mean                             # biased, like torch
    inv = jax.lax.rsqrt(var + EPS)                            # (N, G)
    scale = jnp.repeat(inv, Cg, axis=1) * gamma[None, :]      # (N, C)
    shift = beta[None, :] - jnp.repeat(mean, Cg, axis=1) * scale
    return _build_gn_apply(N, D, H, W, C, td, apply_silu)(
        x, scale.reshape(N, 1, C), shift.reshape(N, 1, C))


# ------------------------------------------------------------------
# Fused "tap" convolution kernel (no im2col in HBM)
# ------------------------------------------------------------------
def _conv_taps_kernel(xf_hbm, w_ref, b_ref, o_ref, xbuf, sem, *,
                      td, kd, offs, mq, dp, dbase):
    # grid = (N, Do // td).  Manually DMA a (td + kd - 1)-plane halo window of
    # the padded, width-flattened input and accumulate one matmul per tap.
    n = pl.program_id(0)
    di = pl.program_id(1)
    d0 = n * dp + dbase + di * td
    cp = pltpu.make_async_copy(xf_hbm.at[pl.ds(d0, td + kd - 1)], xbuf, sem.at[0])
    cp.start()
    cp.wait()

    coutp = o_ref.shape[-1]
    nhw = len(offs)
    bias = b_ref[...]                                        # (1, Coutp)
    for dd in range(td):
        acc = jnp.zeros((mq, coutp), jnp.float32)
        for t_d in range(kd):
            for i, off in enumerate(offs):
                a = xbuf[dd + t_d, off:off + mq, :].astype(MXU_DTYPE)
                acc = acc + jnp.dot(a, w_ref[t_d * nhw + i],
                                    preferred_element_type=jnp.float32)
        o_ref[0, dd] = (acc + bias).astype(o_ref.dtype)


def _pick_td(do, kd, hpwp, cin, mq, coutp, ktaps,
             budget=24 << 20, max_unroll=4):
    best = 1
    for td in range(1, min(do, max_unroll) + 1):
        if do % td:
            continue
        need = ((td + kd - 1) * hpwp * cin * 4         # halo input buffer
                + 3 * td * mq * coutp * 4              # out block (2 bufs) + acc
                + ktaps * cin * coutp * 2)             # bf16 weights
        if need <= budget:
            best = td
    return best


@functools.lru_cache(maxsize=None)
def _build_conv_call(N, Dp, hpwp, cin, ktaps, coutp, td, kd, offs, mq, do, dbase):
    kernel = functools.partial(_conv_taps_kernel, td=td, kd=kd, offs=offs,
                               mq=mq, dp=Dp, dbase=dbase)
    flops = 2 * N * do * mq * cin * coutp * ktaps
    bytes_acc = (N * (do // td) * (td + kd - 1) * hpwp * cin * 4
                 + ktaps * cin * coutp * 2
                 + N * do * mq * coutp * 4)
    call = pl.pallas_call(
        kernel,
        out_shape=jax.ShapeDtypeStruct((N, do, mq, coutp), jnp.float32),
        grid=(N, do // td),
        in_specs=[
            pl.BlockSpec(memory_space=pl.ANY),                       # raw HBM
            pl.BlockSpec((ktaps, cin, coutp), lambda n, di: (0, 0, 0)),
            pl.BlockSpec((1, coutp), lambda n, di: (0, 0)),
        ],
        out_specs=pl.BlockSpec((1, td, mq, coutp), lambda n, di: (n, di, 0, 0)),
        scratch_shapes=[
            pltpu.VMEM((td + kd - 1, hpwp, cin), jnp.float32),
            pltpu.SemaphoreType.DMA((1,)),
        ],
        compiler_params=pltpu.CompilerParams(
            dimension_semantics=("parallel", "arbitrary"),
            vmem_limit_bytes=VMEM_LIMIT),
        cost_estimate=pl.CostEstimate(flops=int(flops), transcendentals=0,
                                      bytes_accessed=int(bytes_acc)),
    )
    return jax.jit(call)


def _fused_conv(xp, w_taps, bias, *, kd, dbase, offs, do, ho, wo, cout):
    """Valid correlation of the padded channels-last input `xp` with per-tap
    (Cin, Cout) matrices; one Pallas kernel, output padded to 128 lanes and in
    flattened-(h,w) row coordinates (gaps removed afterwards)."""
    N, Dp, Hp, Wp, Cin = xp.shape
    hpwp = Hp * Wp
    mq = (ho - 1) * Wp + wo                  # flattened rows incl. width gaps
    coutp = _round_up(cout, LANE)
    ktaps = int(w_taps.shape[0])

    wt = jnp.zeros((ktaps, Cin, coutp), MXU_DTYPE)
    wt = wt.at[:, :, :cout].set(w_taps.astype(MXU_DTYPE))
    bt = jnp.zeros((1, coutp), jnp.float32)
    bt = bt.at[:, :cout].set(bias.astype(jnp.float32).reshape(1, cout))

    td = _pick_td(do, kd, hpwp, Cin, mq, coutp, ktaps)
    call = _build_conv_call(N, Dp, hpwp, Cin, ktaps, coutp, td, kd,
                            tuple(int(o) for o in offs), mq, do, dbase)
    y = call(xp.reshape(N * Dp, hpwp, Cin), wt, bt)

    # Compact: drop the (Wp - wo) gap columns and the lane padding.  The caller
    # fuses any residual add into this same XLA pass.
    y = jnp.pad(y, ((0, 0), (0, 0), (0, ho * Wp - mq), (0, 0)))
    y = y.reshape(N, do, ho, Wp, coutp)
    return y[:, :, :, :wo, :cout]


# ------------------------------------------------------------------
# SamePadConv3d / SamePadConvTranspose3d wrappers (channels-last)
# ------------------------------------------------------------------
def conv3d_same(x, weight, bias, residual=None):
    """SamePadConv3d: k=3, stride 1, replicate padding.
    x: (N,D,H,W,Ci) channels-last; weight: torch layout (Co,Ci,3,3,3)."""
    xp = jnp.pad(x, ((0, 0), (1, 1), (1, 1), (1, 1), (0, 0)), mode="edge")
    N, Dp, Hp, Wp, Ci = xp.shape
    Co = weight.shape[0]
    w_taps = weight.transpose(2, 3, 4, 1, 0).reshape(27, Ci, Co)
    offs = [kh * Wp + kw for kh in range(3) for kw in range(3)]
    y = _fused_conv(xp, w_taps, bias, kd=3, dbase=0, offs=offs,
                    do=Dp - 2, ho=Hp - 2, wo=Wp - 2, cout=Co)
    if residual is not None:
        y = y + residual                     # fused into the compaction pass
    return y


def conv_transpose3d_same(x, weight, bias, stride):
    """SamePadConvTranspose3d: k=4, torch padding=3, replicate pre-pad, done via
    sub-pixel decomposition (phase kernels) - no zero-dilated volume.
    x: (N,D,H,W,Ci) channels-last; weight: torch layout (Ci,Co,4,4,4)."""
    k = 4
    sd, sh, sw = stride
    pads = [_same_pad(k, s) for s in (sd, sh, sw)]
    xp = jnp.pad(x, ((0, 0), pads[0], pads[1], pads[2], (0, 0)), mode="edge")
    N, Dp, Hp, Wp, Ci = xp.shape
    Co = weight.shape[1]
    # equivalent correlation kernel: spatial flip + channel swap -> (kd,kh,kw,Ci,Co)
    wc = jnp.flip(weight, axis=(2, 3, 4)).transpose(2, 3, 4, 0, 1)

    def phase(s_ax, p):
        taps = [t for t in range(k) if (p + t) % s_ax == 0]
        base = (p + taps[0]) // s_ax
        return taps, base

    od, oh, ow = (Dp - 1) * sd - 2, (Hp - 1) * sh - 2, (Wp - 1) * sw - 2
    md, mh, mw = od // sd, oh // sh, ow // sw

    outs = []
    for pd in range(sd):
        tds, bd = phase(sd, pd)
        for ph in range(sh):
            ths, bh = phase(sh, ph)
            for pw in range(sw):
                tws, bw = phase(sw, pw)
                wp_ = wc[np.array(tds)][:, np.array(ths)][:, :, np.array(tws)]
                w_taps = wp_.reshape(len(tds) * len(ths) * len(tws), Ci, Co)
                offs = [(bh + ih) * Wp + (bw + iw)
                        for ih in range(len(ths)) for iw in range(len(tws))]
                outs.append(_fused_conv(xp, w_taps, bias, kd=len(tds), dbase=bd,
                                        offs=offs, do=md, ho=mh, wo=mw, cout=Co))
    # Interleave the phase outputs back into the upsampled volume.
    y = jnp.stack(outs, 0).reshape(sd, sh, sw, N, md, mh, mw, Co)
    y = y.transpose(3, 4, 0, 5, 1, 6, 2, 7).reshape(N, od, oh, ow, Co)
    return y


# ------------------------------------------------------------------
# Decoder parameters & forward
# ------------------------------------------------------------------
def _init_norm(key, c):
    k1, k2 = jax.random.split(key)
    gamma = 1.0 + 0.1 * jax.random.normal(k1, (c,), jnp.float32)
    beta = 0.1 * jax.random.normal(k2, (c,), jnp.float32)
    return gamma, beta


def _init_conv(key, co, ci, k):
    k1, k2 = jax.random.split(key)
    std = 1.0 / math.sqrt(ci * k ** 3)
    w = std * jax.random.normal(k1, (co, ci, k, k, k), jnp.float32)
    b = std * jax.random.normal(k2, (co,), jnp.float32)
    return w, b


def _init_convT(key, ci, co, k):
    k1, k2 = jax.random.split(key)
    std = 1.0 / math.sqrt(ci * k ** 3)
    w = std * jax.random.normal(k1, (ci, co, k, k, k), jnp.float32)
    b = std * jax.random.normal(k2, (co,), jnp.float32)
    return w, b


def _init_resblock(key, c):
    ks = jax.random.split(key, 4)
    n1g, n1b = _init_norm(ks[0], c)
    c1w, c1b = _init_conv(ks[1], c, c, 3)
    n2g, n2b = _init_norm(ks[2], c)
    c2w, c2b = _init_conv(ks[3], c, c, 3)
    return dict(n1g=n1g, n1b=n1b, c1w=c1w, c1b=c1b,
                n2g=n2g, n2b=n2b, c2w=c2w, c2b=c2b)


def init_decoder_params(key, n_hiddens, upsample, image_channel, num_groups):
    n_times_upsample = np.array([int(math.log2(d)) for d in upsample])
    max_us = int(n_times_upsample.max())
    in_channels = n_hiddens * 2 ** max_us

    keys = jax.random.split(key, 2 + max_us)
    params = {}
    params["final_g"], params["final_b"] = _init_norm(keys[0], in_channels)

    blocks = []
    out_channels = in_channels
    for i in range(max_us):
        in_ch = in_channels if i == 0 else n_hiddens * 2 ** (max_us - i + 1)
        out_channels = n_hiddens * 2 ** (max_us - i)
        us = tuple(2 if d > 0 else 1 for d in n_times_upsample)
        bks = jax.random.split(keys[1 + i], 3)
        upw, upb = _init_convT(bks[0], in_ch, out_channels, 4)
        blocks.append(dict(up_w=upw, up_b=upb, stride=us,
                           res1=_init_resblock(bks[1], out_channels),
                           res2=_init_resblock(bks[2], out_channels)))
        n_times_upsample = n_times_upsample - 1
    params["blocks"] = blocks
    params["last_w"], params["last_b"] = _init_conv(keys[-1], image_channel,
                                                    out_channels, 3)
    return params


def resblock_forward(x, p, num_groups):
    h = group_norm_silu(x, p["n1g"], p["n1b"], num_groups)
    h = conv3d_same(h, p["c1w"], p["c1b"])
    h = group_norm_silu(h, p["n2g"], p["n2b"], num_groups)
    h = conv3d_same(h, p["c2w"], p["c2b"], residual=x)   # residual fused epilogue
    return h


def decoder_forward(params, x, num_groups):
    """x: (N, C, D, H, W) like the torch module; returns (N, image_channel, ...)."""
    h = jnp.transpose(x, (0, 2, 3, 4, 1))                # channels-last inside
    h = group_norm_silu(h, params["final_g"], params["final_b"], num_groups)
    for blk in params["blocks"]:
        h = conv_transpose3d_same(h, blk["up_w"], blk["up_b"], blk["stride"])
        h = resblock_forward(h, blk["res1"], num_groups)
        h = resblock_forward(h, blk["res2"], num_groups)
    h = conv3d_same(h, params["last_w"], params["last_b"])
    return jnp.transpose(h, (0, 4, 1, 2, 3))             # back to NCDHW


# ------------------------------------------------------------------
if __name__ == "__main__":
    # Small config: n_hiddens=8, upsample=(2,2,2) -> max_us=1, latent C=16.
    n_hiddens, upsample, image_channel, num_groups = 8, (2, 2, 2), 3, 4

    key = jax.random.PRNGKey(0)
    pkey, xkey = jax.random.split(key)
    params = init_decoder_params(pkey, n_hiddens, upsample, image_channel,
                                 num_groups)

    # latent input: (N, C=16, D=4, H=4, W=4)  ->  output (N, 3, 8, 8, 8)
    x = jax.random.normal(xkey, (2, 16, 4, 4, 4), jnp.float32)

    out = decoder_forward(params, x, num_groups)
    out = jax.block_until_ready(out)
    assert out.shape == (2, image_channel, 8, 8, 8), out.shape
    assert bool(jnp.all(jnp.isfinite(out)))
    print("KERNEL_OK")
</pallas_src>

<mosaic_0001>
module attributes {stable_mosaic.version = 11 : i64} {
  func.func @_gn_stats_kernel(%arg0: i32, %arg1: i32, %arg2: memref<1x4x4x4x16xf32, #tpu.memory_space<vmem>>, %arg3: memref<1x2x16xf32, #tpu.memory_space<vmem>>) attributes {dimension_semantics = [#tpu.dimension_semantics<parallel>, #tpu.dimension_semantics<arbitrary>], iteration_bounds = array<i64: 2, 1>, scalar_prefetch = 0 : i64, scratch_operands = 0 : i64, tpu.core_type = #tpu.core_type<tc>, window_params = [{transform_indices = @transform_0, window_bounds = array<i64: 1, 4, 4, 4, 16>}, {transform_indices = @transform_1, window_bounds = array<i64: 1, 2, 16>}]} {
    %c0_i32 = arith.constant 0 : i32
    %0 = arith.cmpi eq, %arg1, %c0_i32 : i32
    %1 = arith.extui %0 : i1 to i32
    %c0_i32_0 = arith.constant 0 : i32
    %2 = arith.cmpi ne, %1, %c0_i32_0 : i32
    scf.if %2 {
      %cst_21 = arith.constant 0.000000e+00 : f32
      %26 = vector.broadcast %cst_21 : f32 to vector<1x2x16xf32>
      %c0_22 = arith.constant 0 : index
      %c0_23 = arith.constant 0 : index
      %c0_24 = arith.constant 0 : index
      %27 = vector.load %arg3[%c0_22, %c0_23, %c0_24] : memref<1x2x16xf32, #tpu.memory_space<vmem>>, vector<1x2x16xf32>
      tpu.vector_store %arg3[%c0_22, %c0_23, %c0_24], %26 {strides = array<i32>} : memref<1x2x16xf32, #tpu.memory_space<vmem>>, vector<1x2x16xf32>,
    } else {
    }
    %c0 = arith.constant 0 : index
    %c0_1 = arith.constant 0 : index
    %c0_2 = arith.constant 0 : index
    %c0_3 = arith.constant 0 : index
    %c0_4 = arith.constant 0 : index
    %3 = vector.load %arg2[%c0, %c0_1, %c0_2, %c0_3, %c0_4] : memref<1x4x4x4x16xf32, #tpu.memory_space<vmem>>, vector<1x4x4x4x16xf32>
    %4 = vector.shape_cast %3 : vector<1x4x4x4x16xf32> to vector<4x4x4x16xf32>
    %5 = arith.mulf %4, %4 : vector<4x4x4x16xf32>
    %cst = arith.constant dense<0.000000e+00> : vector<4x4x16xf32>
    %6 = vector.multi_reduction <add>, %4, %cst [0] : vector<4x4x4x16xf32> to vector<4x4x16xf32>
    %cst_5 = arith.constant dense<0.000000e+00> : vector<4x16xf32>
    %7 = vector.multi_reduction <add>, %6, %cst_5 [0] : vector<4x4x16xf32> to vector<4x16xf32>
    %cst_6 = arith.constant dense<0.000000e+00> : vector<16xf32>
    %8 = vector.multi_reduction <add>, %7, %cst_6 [0] : vector<4x16xf32> to vector<16xf32>
    %9 = vector.shape_cast %8 : vector<16xf32> to vector<1x16xf32>
    %cst_7 = arith.constant dense<0.000000e+00> : vector<4x4x16xf32>
    %10 = vector.multi_reduction <add>, %5, %cst_7 [0] : vector<4x4x4x16xf32> to vector<4x4x16xf32>
    %cst_8 = arith.constant dense<0.000000e+00> : vector<4x16xf32>
    %11 = vector.multi_reduction <add>, %10, %cst_8 [0] : vector<4x4x16xf32> to vector<4x16xf32>
    %cst_9 = arith.constant dense<0.000000e+00> : vector<16xf32>
    %12 = vector.multi_reduction <add>, %11, %cst_9 [0] : vector<4x16xf32> to vector<16xf32>
    %13 = vector.shape_cast %12 : vector<16xf32> to vector<1x16xf32>
    %c0_10 = arith.constant 0 : index
    %c0_11 = arith.constant 0 : index
    %c0_12 = arith.constant 0 : index
    %14 = vector.load %arg3[%c0_10, %c0_11, %c0_12] : memref<1x2x16xf32, #tpu.memory_space<vmem>>, vector<1x1x16xf32>
    %15 = vector.shape_cast %14 : vector<1x1x16xf32> to vector<1x16xf32>
    %16 = arith.addf %15, %9 : vector<1x16xf32>
    %c0_13 = arith.constant 0 : index
    %c0_14 = arith.constant 0 : index
    %c0_15 = arith.constant 0 : index
    %17 = vector.load %arg3[%c0_13, %c0_14, %c0_15] : memref<1x2x16xf32, #tpu.memory_space<vmem>>, vector<1x1x16xf32>
    %18 = vector.shape_cast %17 : vector<1x1x16xf32> to vector<1x16xf32>
    %19 = vector.shape_cast %16 : vector<1x16xf32> to vector<1x1x16xf32>
    tpu.vector_store %arg3[%c0_13, %c0_14, %c0_15], %19 {strides = array<i32>} : memref<1x2x16xf32, #tpu.memory_space<vmem>>, vector<1x1x16xf32>,
    %c0_16 = arith.constant 0 : index
    %c1 = arith.constant 1 : index
    %c0_17 = arith.constant 0 : index
    %20 = vector.load %arg3[%c0_16, %c1, %c0_17] : memref<1x2x16xf32, #tpu.memory_space<vmem>>, vector<1x1x16xf32>
    %21 = vector.shape_cast %20 : vector<1x1x16xf32> to vector<1x16xf32>
    %22 = arith.addf %21, %13 : vector<1x16xf32>
    %c0_18 = arith.constant 0 : index
    %c1_19 = arith.constant 1 : index
    %c0_20 = arith.constant 0 : index
    %23 = vector.load %arg3[%c0_18, %c1_19, %c0_20] : memref<1x2x16xf32, #tpu.memory_space<vmem>>, vector<1x1x16xf32>
    %24 = vector.shape_cast %23 : vector<1x1x16xf32> to vector<1x16xf32>
    %25 = vector.shape_cast %22 : vector<1x16xf32> to vector<1x1x16xf32>
    tpu.vector_store %arg3[%c0_18, %c1_19, %c0_20], %25 {strides = array<i32>} : memref<1x2x16xf32, #tpu.memory_space<vmem>>, vector<1x1x16xf32>,
    return
  }
  func.func @transform_0(%arg0: i32, %arg1: i32) -> (i32, i32, i32, i32, i32) {
    %c0_i32 = arith.constant 0 : i32
    %c0_i32_0 = arith.constant 0 : i32
    %c0_i32_1 = arith.constant 0 : i32
    %c0_i32_2 = arith.constant 0 : i32
    return %arg0, %arg1, %c0_i32, %c0_i32_0, %c0_i32_1 : i32, i32, i32, i32, i32
  }
  func.func @transform_1(%arg0: i32, %arg1: i32) -> (i32, i32, i32) {
    %c0_i32 = arith.constant 0 : i32
    %c0_i32_0 = arith.constant 0 : i32
    %c0_i32_1 = arith.constant 0 : i32
    return %arg0, %c0_i32, %c0_i32_0 : i32, i32, i32
  }
}

</mosaic_0001>

<llo_original>
// kernel: tpu_custom_call.1
$region0: #{tpu_custom_call.1}
  #allocation0 [shape = 'u32[]', space=smem, size = 0x4, offset = 0x4, fixed_abs, tag = 'smem constant byte address 0x4 - core index']
  #allocation1 [shape = 'u32[144,128]{1,0:T(1,128)}', space=vmem, size = 0x12000, scoped, tag = 'internal scratch']
  %s0 = inlined_call_operand.hbm [shape: f32[2,4,4,4,16], index: 0, kind: input, shape index: {}]
  %s1 = inlined_call_operand.hbm [shape: f32[2,2,16], index: 1, kind: output, shape index: {}]
  %s2 = sld [smem:[#allocation0]]
  $region45: #{tpu_custom_call.1} parent=0
    _
  %s4 = ssub.s32 1, %s2
  %s5 = scalar_select 0, %s4, %s2
  $region1: #{tpu_custom_call.1} parent=0
    #allocation2 [shape = 'u8[65536]{0}', space=vmem, size = 0x10000, scoped, tag = 'input window, operand 0']
    #allocation3 [shape = 's32[2]{0}', space=sflag, size = 0x8, scoped, tag = 'scoped memory for tpu_custom_call.1']
    #allocation4 [shape = 's32[2]{0}', space=sflag, size = 0x8, scoped, tag = 'scoped memory for tpu_custom_call.1']
    #allocation5 [shape = 'u8[2048]{0}', space=vmem, size = 0x800, scoped, tag = 'output window, operand 0']
    %6 = vsyncpa [#allocation3], 0
    %s7 = scalar_lea.sflag [#allocation3], 1
    %8 = vsyncpa %s7, 0
    %9 = vsyncpa [#allocation4], 0
    %s10 = scalar_lea.sflag [#allocation4], 1
    %11 = vsyncpa %s10, 0
    loop: start=0, step=1, limit=4
    $region2: #{tpu_custom_call.1} parent=1 // loop_pre_header
      _
    $region3: #{tpu_custom_call.1} parent=1 // loop_header
      %s13 = sphi 0, %s17
      %p14 = scmp.ge.s32.totalorder %s13, 4
      %s20 = sphi 0, %s32
      %s21 = sphi 0, %s28
      %s22 = sphi 0, %s20
      %s23 = sphi 0, %s21
      %s24 = sphi 0, %s22
      %s25 = sphi 0, %s23
      %s37 = sphi 0, %s39
      %s40 = sphi 0, %s37
      %s41 = sphi 0, %s40
      %s57 = sphi 0, %s41
      %s63 = sphi 0, %s65
      %s66 = sphi 0, %s63
      %s67 = sphi 0, %s66
      %s83 = sphi 0, %s67
    $region4: #{tpu_custom_call.1} parent=1 // loop_header_branch
      %16 = sbr.rel (%p14) target = $region8
    $region5: #{tpu_custom_call.1} parent=1 // loop_body
      %s18 = ssub.s32 %s13, 1
      %s19 = ssub.s32 %s13, 2
      %s26 = sadd.s32 1, %s21
      %p27 = scmp.ge.s32.totalorder %s26, 1
      %s28 = scalar_select %p27, 0, %s26
      %s29 = sadd.s32 1, %s20
      %s30 = scalar_select %p27, %s29, %s20
      %p31 = scmp.ge.s32.totalorder %s30, 2
      %s32 = scalar_select %p31, 0, %s30
      %s33 = ssub.s32 %s20, %s32
      %s34 = ssub.s32 %s21, %s28
      %s35 = sor.u32 %s33, %s34
      %p36 = scmp.eq.s32.totalorder %s35, 0
      %s38 = sadd.s32 %s37, 1
      %s39 = scalar_select %p36, %s37, %s38
      %p42 = pneg %p36
      %p43 = scmp.eq.s32.totalorder %s13, 1
      %p44 = por %p42, %p43
      %p45 = scmp.ne.s32.totalorder %s37, %s40
      %p46 = scmp.eq.s32.totalorder %s13, 0
      %p47 = por %p45, %p46
      %p48 = scmp.ne.s32.totalorder %s37, %s40
      %p49 = scmp.eq.s32.totalorder %s18, 1
      %p50 = por %p48, %p49
      %p51 = scmp.ne.s32.totalorder %s40, %s41
      %p52 = scmp.eq.s32.totalorder %s18, 0
      %p53 = por %p51, %p52
      %p54 = scmp.ne.s32.totalorder %s40, %s41
      %p55 = scmp.eq.s32.totalorder %s19, 1
      %p56 = por %p54, %p55
      %p58 = scmp.ne.s32.totalorder %s41, %s57
      %p59 = scmp.eq.s32.totalorder %s19, 0
      %p60 = por %p58, %p59
      %s61 = ssub.s32 %s20, %s32
      %p62 = scmp.eq.s32.totalorder %s61, 0
      %s64 = sadd.s32 %s63, 1
      %s65 = scalar_select %p62, %s63, %s64
      %p68 = pneg %p62
      %p69 = scmp.eq.s32.totalorder %s13, 1
      %p70 = por %p68, %p69
      %p71 = scmp.ne.s32.totalorder %s63, %s66
      %p72 = scmp.eq.s32.totalorder %s13, 0
      %p73 = por %p71, %p72
      %p74 = scmp.ne.s32.totalorder %s63, %s66
      %p75 = scmp.eq.s32.totalorder %s18, 1
      %p76 = por %p74, %p75
      %p77 = scmp.ne.s32.totalorder %s66, %s67
      %p78 = scmp.eq.s32.totalorder %s18, 0
      %p79 = por %p77, %p78
      %p80 = scmp.ne.s32.totalorder %s66, %s67
      %p81 = scmp.eq.s32.totalorder %s19, 1
      %p82 = por %p80, %p81
      %p84 = scmp.ne.s32.totalorder %s67, %s83
      %p85 = scmp.eq.s32.totalorder %s19, 0
      %p86 = por %p84, %p85
      %p87 = scmp.le.s32.totalorder 1, %s13
      %p88 = scmp.lt.s32.totalorder %s13, 3
      %p89 = pnand %p87, %p88
      %p90 = pneg %p89
      // Predicated region
      $region9: #{tpu_custom_call.1} parent=5 // pred_check
        _
      $region10: #{tpu_custom_call.1} parent=5 // pred_check_branch
        %92 = sbr.rel (%p89) target = $region12
      $region11: #{tpu_custom_call.1} parent=5 // pred_region
        %s93 = ssub.s32 %s13, 1
      $region12: #{tpu_custom_call.1} parent=5 // pred_fallthru
        _
      %p94 = scmp.lt.s32.totalorder %s13, 2
      // Predicated region
      $region13: #{tpu_custom_call.1} parent=5 // pred_check
        %p95 = pneg %p94
      $region14: #{tpu_custom_call.1} parent=5 // pred_check_branch
        %97 = sbr.rel (%p95) target = $region16
      $region15: #{tpu_custom_call.1} parent=5 // pred_region
        // Predicated region
        $region17: #{tpu_custom_call.1} parent=15 // pred_check
          %p98 = pneg %p47
        $region18: #{tpu_custom_call.1} parent=15 // pred_check_branch
          %100 = sbr.rel (%p98) target = $region20
        $region19: #{tpu_custom_call.1} parent=15 // pred_region
          %s101 = sand.u32 %s37, 1
          %s102 = scalar_lea.sflag [#allocation3], %s101
          %s103 = sand.u32 %s37, 1
          %s104 = smul.addr %s103, 64
          %s105 = scalar_lea.vmem [#allocation2], %s104
          %s106 = smul.u32 4, %s21
          %s108 = ssub.s32 1024, 1024
          %109 = vsyncadd %s102, %s108
          %s110 = smul.addr %s106, 4
          %s111 = smul.addr %s20, 16
          %s112 = sadd.s32 %s110, %s111
          %s113 = smul.addr %s112, 64
          %s114 = scalar_lea.hbm %s0, %s113
          %s115 = sshll.u32 %s105, 4
          %s116 = int_to_ptr.vmem [resolvable:$true] %s115
          %121 = dma.hbm_to_vmem [thread:$0]  %s114, 1024, %s116, %s102, 64, 64, 4
        $region20: #{tpu_custom_call.1} parent=15 // pred_fallthru
          _
      $region16: #{tpu_custom_call.1} parent=5 // pred_fallthru
        _
      %p122 = scmp.le.s32.totalorder 1, %s13
      %p123 = scmp.lt.s32.totalorder %s13, 3
      %p124 = pnand %p122, %p123
      %p125 = pneg %p124
      // Predicated region
      $region21: #{tpu_custom_call.1} parent=5 // pred_check
        _
      $region22: #{tpu_custom_call.1} parent=5 // pred_check_branch
        %127 = sbr.rel (%p124) target = $region24
      $region23: #{tpu_custom_call.1} parent=5 // pred_region
        %s128 = ssub.s32 %s13, 1
        %s129 = sand.u32 %s40, 1
        %s130 = scalar_lea.sflag [#allocation3], %s129
        %s131 = sand.u32 %s40, 1
        %s132 = smul.addr %s131, 64
        %s133 = scalar_lea.vmem [#allocation2], %s132
        // Predicated region
        $region25: #{tpu_custom_call.1} parent=23 // pred_check
          %p134 = pneg %p53
        $region26: #{tpu_custom_call.1} parent=23 // pred_check_branch
          %136 = sbr.rel (%p134) target = $region28
        $region27: #{tpu_custom_call.1} parent=23 // pred_region
          %137 = dma.done %s130, 1024
        $region28: #{tpu_custom_call.1} parent=23 // pred_fallthru
          _
        %s138 = sand.u32 %s40, 1
        %s139 = scalar_lea.sflag [#allocation3], %s138
        %s140 = sand.u32 %s40, 1
        %s141 = smul.addr %s140, 64
        %s142 = scalar_lea.vmem [#allocation2], %s141
        %p143 = pneg %p53
        %p144 = pneg %p50
        %p145 = pneg %p79
        %p146 = pneg %p76
        %s147 = sand.u32 %s66, 1
        %s148 = scalar_lea.sflag [#allocation4], %s147
        %s149 = sand.u32 %s66, 1
        %s150 = smul.addr %s149, 2
        %s151 = scalar_lea.vmem [#allocation5], %s150
        %s152 = smul.u32 4, %s23
        %p153 = scmp.eq.s32.totalorder %s23, 0
        // Predicated region
        $region29: #{tpu_custom_call.1} parent=23 // pred_check
          %p154 = pneg %p153
        $region30: #{tpu_custom_call.1} parent=23 // pred_check_branch
          %156 = sbr.rel (%p154) target = $region32
        $region31: #{tpu_custom_call.1} parent=23 // pred_region
          %vm157 = vcmask 123904
          %158 = vst.msk [vmem:[%s151] sm:$0x3] %vm157, 0.0
        $region32: #{tpu_custom_call.1} parent=23 // pred_fallthru
          _
        %v159 = vld [vmem:[%s133] sm:$0xf]
        %v160 = vld [vmem:[%s133 + $0x4] sm:$0xf]
        %v161 = vld [vmem:[%s133 + $0x8] sm:$0xf]
        %v162 = vld [vmem:[%s133 + $0xc] sm:$0xf]
        %v163 = vld [vmem:[%s133 + $0x10] sm:$0xf]
        %v164 = vld [vmem:[%s133 + $0x14] sm:$0xf]
        %v165 = vld [vmem:[%s133 + $0x18] sm:$0xf]
        %v166 = vld [vmem:[%s133 + $0x1c] sm:$0xf]
        %v167 = vld [vmem:[%s133 + $0x20] sm:$0xf]
        %v168 = vld [vmem:[%s133 + $0x24] sm:$0xf]
        %v169 = vld [vmem:[%s133 + $0x28] sm:$0xf]
        %v170 = vld [vmem:[%s133 + $0x2c] sm:$0xf]
        %v171 = vld [vmem:[%s133 + $0x30] sm:$0xf]
        %v172 = vld [vmem:[%s133 + $0x34] sm:$0xf]
        %v173 = vld [vmem:[%s133 + $0x38] sm:$0xf]
        %v174 = vld [vmem:[%s133 + $0x3c] sm:$0xf]
        %v175 = vmul.f32 %v159, %v159
        %v176 = vmul.f32 %v160, %v160
        %v177 = vmul.f32 %v161, %v161
        %v178 = vmul.f32 %v162, %v162
        %v179 = vmul.f32 %v163, %v163
        %v180 = vmul.f32 %v164, %v164
        %v181 = vmul.f32 %v165, %v165
        %v182 = vmul.f32 %v166, %v166
        %v183 = vmul.f32 %v167, %v167
        %v184 = vmul.f32 %v168, %v168
        %v185 = vmul.f32 %v169, %v169
        %v186 = vmul.f32 %v170, %v170
        %v187 = vmul.f32 %v171, %v171
        %v188 = vmul.f32 %v172, %v172
        %v189 = vmul.f32 %v173, %v173
        %v190 = vmul.f32 %v174, %v174
        %vm191 = vcmask 125952
        %v192 = vsel %vm191, %v159, 0.0
        %v193 = vsel %vm191, %v163, 0.0
        %v194 = vadd.f32 %v192, %v193
        %v195 = vsel %vm191, %v167, 0.0
        %v196 = vadd.f32 %v194, %v195
        %v197 = vsel %vm191, %v171, 0.0
        %v198 = vadd.f32 %v196, %v197
        %v199 = vsel %vm191, %v160, 0.0
        %v200 = vsel %vm191, %v164, 0.0
        %v201 = vadd.f32 %v199, %v200
        %v202 = vsel %vm191, %v168, 0.0
        %v203 = vadd.f32 %v201, %v202
        %v204 = vsel %vm191, %v172, 0.0
        %v205 = vadd.f32 %v203, %v204
        %v206 = vsel %vm191, %v161, 0.0
        %v207 = vsel %vm191, %v165, 0.0
        %v208 = vadd.f32 %v206, %v207
        %v209 = vsel %vm191, %v169, 0.0
        %v210 = vadd.f32 %v208, %v209
        %v211 = vsel %vm191, %v173, 0.0
        %v212 = vadd.f32 %v210, %v211
        %v213 = vsel %vm191, %v162, 0.0
        %v214 = vsel %vm191, %v166, 0.0
        %v215 = vadd.f32 %v213, %v214
        %v216 = vsel %vm191, %v170, 0.0
        %v217 = vadd.f32 %v215, %v216
        %v218 = vsel %vm191, %v174, 0.0
        %v219 = vadd.f32 %v217, %v218
        %v220 = vsel %vm191, %v198, 0.0
        %v221 = vsel %vm191, %v205, 0.0
        %v222 = vadd.f32 %v220, %v221
        %v223 = vsel %vm191, %v212, 0.0
        %v224 = vadd.f32 %v222, %v223
        %v225 = vsel %vm191, %v219, 0.0
        %v226 = vadd.f32 %v224, %v225
        %v227 = vsel %vm191, %v226, 0.0
        %v228 = vrot.slane %v227, 4
        %v229 = vadd.f32 %v227, %v228
        %v230 = vrot.slane %v229, 2
        %v231 = vadd.f32 %v229, %v230
        %v232 = vrot.slane %v231, 1
        %v233 = vadd.f32 %v231, %v232
        %v234 = vsel %vm191, %v175, 0.0
        %v235 = vsel %vm191, %v179, 0.0
        %v236 = vadd.f32 %v234, %v235
        %v237 = vsel %vm191, %v183, 0.0
        %v238 = vadd.f32 %v236, %v237
        %v239 = vsel %vm191, %v187, 0.0
        %v240 = vadd.f32 %v238, %v239
        %v241 = vsel %vm191, %v176, 0.0
        %v242 = vsel %vm191, %v180, 0.0
        %v243 = vadd.f32 %v241, %v242
        %v244 = vsel %vm191, %v184, 0.0
        %v245 = vadd.f32 %v243, %v244
        %v246 = vsel %vm191, %v188, 0.0
        %v247 = vadd.f32 %v245, %v246
        %v248 = vsel %vm191, %v177, 0.0
        %v249 = vsel %vm191, %v181, 0.0
        %v250 = vadd.f32 %v248, %v249
        %v251 = vsel %vm191, %v185, 0.0
        %v252 = vadd.f32 %v250, %v251
        %v253 = vsel %vm191, %v189, 0.0
        %v254 = vadd.f32 %v252, %v253
        %v255 = vsel %vm191, %v178, 0.0
        %v256 = vsel %vm191, %v182, 0.0
        %v257 = vadd.f32 %v255, %v256
        %v258 = vsel %vm191, %v186, 0.0
        %v259 = vadd.f32 %v257, %v258
        %v260 = vsel %vm191, %v190, 0.0
        %v261 = vadd.f32 %v259, %v260
        %v262 = vsel %vm191, %v240, 0.0
        %v263 = vsel %vm191, %v247, 0.0
        %v264 = vadd.f32 %v262, %v263
        %v265 = vsel %vm191, %v254, 0.0
        %v266 = vadd.f32 %v264, %v265
        %v267 = vsel %vm191, %v261, 0.0
        %v268 = vadd.f32 %v266, %v267
        %v269 = vsel %vm191, %v268, 0.0
        %v270 = vrot.slane %v269, 4
        %v271 = vadd.f32 %v269, %v270
        %v272 = vrot.slane %v271, 2
        %v273 = vadd.f32 %v271, %v272
        %v274 = vrot.slane %v273, 1
        %v275 = vadd.f32 %v273, %v274
        %v276 = vld [vmem:[%s151] sm:$0x1]
        %v277 = vadd.f32 %v276, %v233
        %vm278 = vcmask 122880
        %279 = vst.msk [vmem:[%s151] sm:$0x1] %vm278, %v277
        %v280 = vld [vmem:[%s151 + $0x1] sm:$0x1]
        %v281 = vadd.f32 %v280, %v275
        %282 = vst.msk [vmem:[%s151 + $0x1] sm:$0x1] %vm278, %v281
        %s283 = sand.u32 %s66, 1
        %s284 = scalar_lea.sflag [#allocation4], %s283
        %s285 = sand.u32 %s66, 1
        %s286 = smul.addr %s285, 2
        %s287 = scalar_lea.vmem [#allocation5], %s286
        // Predicated region
        $region33: #{tpu_custom_call.1} parent=23 // pred_check
          %p288 = pneg %p76
        $region34: #{tpu_custom_call.1} parent=23 // pred_check_branch
          %290 = sbr.rel (%p288) target = $region36
        $region35: #{tpu_custom_call.1} parent=23 // pred_region
          %s292 = ssub.s32 32, 32
          %293 = vsyncadd %s284, %s292
          %s294 = smul.addr %s22, 32
          %s295 = scalar_lea.hbm %s1, %s294
          %s297 = sshll.u32 %s287, 4
          %s298 = int_to_ptr.vmem [resolvable:$true] %s297
          %300 = dma.vmem_to_hbm [thread:$0]  %s298, 32, %s295, %s284
        $region36: #{tpu_custom_call.1} parent=23 // pred_fallthru
          _
      $region24: #{tpu_custom_call.1} parent=5 // pred_fallthru
        _
      %p301 = scmp.le.s32.totalorder 2, %s13
      // Predicated region
      $region37: #{tpu_custom_call.1} parent=5 // pred_check
        %p302 = pneg %p301
      $region38: #{tpu_custom_call.1} parent=5 // pred_check_branch
        %304 = sbr.rel (%p302) target = $region40
      $region39: #{tpu_custom_call.1} parent=5 // pred_region
        %s305 = ssub.s32 %s13, 2
        // Predicated region
        $region41: #{tpu_custom_call.1} parent=39 // pred_check
          %p306 = pneg %p82
        $region42: #{tpu_custom_call.1} parent=39 // pred_check_branch
          %308 = sbr.rel (%p306) target = $region44
        $region43: #{tpu_custom_call.1} parent=39 // pred_region
          %s309 = sand.u32 %s67, 1
          %s310 = scalar_lea.sflag [#allocation4], %s309
          %s311 = sand.u32 %s67, 1
          %s312 = smul.addr %s311, 2
          %s313 = scalar_lea.vmem [#allocation5], %s312
          %314 = dma.done %s310, 32
        $region44: #{tpu_custom_call.1} parent=39 // pred_fallthru
          _
      $region40: #{tpu_custom_call.1} parent=5 // pred_fallthru
        _
    $region6: #{tpu_custom_call.1} parent=1 // loop_footer
      %s17 = sadd.s32 1, %s13
    $region7: #{tpu_custom_call.1} parent=1 // loop_footer_branch
      %12 = sbr.rel target = $region3
    $region8: #{tpu_custom_call.1} parent=1 // loop_exit
      _
    %315 = vsyncpa [#allocation3], 1
    %s316 = scalar_lea.sflag [#allocation3], 1
    %317 = vsyncpa %s316, 1
    %318 = vsyncpa [#allocation4], 1
    %s319 = scalar_lea.sflag [#allocation4], 1
    %320 = vsyncpa %s319, 1

</llo_original>
